<compile_context>
chip_gen: v6e
topology: v6e:2x2x1
jax: 0.10.0
libtpu: 0.0.40
codegen_flags: <defaults>
</compile_context>

<pallas_src>
import jax
import jax.numpy as jnp
from jax.experimental import pallas as pl
from jax.experimental.pallas import tpu as pltpu


def _mlp_kernel(x_ref, w1_ref, b1_ref, w2_ref, b2_ref, w3_ref, b3_ref, o_ref):
    # Layer 1: (TB,75)bf16 @ (75,128)bf16 -> f32, +bias, relu
    h1 = jnp.dot(x_ref[...], w1_ref[...], preferred_element_type=jnp.float32)
    h1 = jnp.maximum(h1 + b1_ref[...], 0.0)
    # Layer 2: (TB,128)bf16 @ (128,128)bf16 -> f32, +bias, relu
    h2 = jnp.dot(h1.astype(jnp.bfloat16), w2_ref[...],
                 preferred_element_type=jnp.float32)
    h2 = jnp.maximum(h2 + b2_ref[...], 0.0)
    # Output layer: (TB,128)bf16 @ (128,3)bf16 -> f32, +bias, sigmoid
    logits = jnp.dot(h2.astype(jnp.bfloat16), w3_ref[...],
                     preferred_element_type=jnp.float32)
    o_ref[...] = jax.nn.sigmoid(logits + b3_ref[...]).astype(o_ref.dtype)


def _round_up(n, m):
    return ((n + m - 1) // m) * m


def neural_network_forward(x, params):
    """x: (B, 75) float32.  params: dict of f32 weights/biases.  Returns (B, 3) f32."""
    B, F = x.shape
    assert F == 75

    # bf16 for the MXU operands; biases stay f32 for the epilogue.
    w1 = params["w1"].astype(jnp.bfloat16)
    w2 = params["w2"].astype(jnp.bfloat16)
    w3 = params["w3"].astype(jnp.bfloat16)
    b1, b2, b3 = params["b1"], params["b2"], params["b3"]

    # Batch tiling: large tiles for pipelining, multiple of 16 (bf16 sublane
    # packing).  Pad B so every tile is full and DMAs stay rectangular.
    TILE_B = min(1024, _round_up(B, 16))
    B_pad = _round_up(B, TILE_B)
    if B_pad != B:
        x = jnp.pad(x, ((0, B_pad - B), (0, 0)))
    x = x.astype(jnp.bfloat16)

    grid = (B_pad // TILE_B,)
    const = lambda i: (0, 0)  # weights/biases: same block every step (stay resident)

    out = pl.pallas_call(
        _mlp_kernel,
        out_shape=jax.ShapeDtypeStruct((B_pad, 3), jnp.float32),
        grid_spec=pltpu.PrefetchScalarGridSpec(
            num_scalar_prefetch=0,
            grid=grid,
            in_specs=[
                pl.BlockSpec((TILE_B, 75), lambda i: (i, 0)),   # x tile (streamed)
                pl.BlockSpec((75, 128), const),                 # w1
                pl.BlockSpec((1, 128), const),                  # b1
                pl.BlockSpec((128, 128), const),                # w2
                pl.BlockSpec((1, 128), const),                  # b2
                pl.BlockSpec((128, 3), const),                  # w3
                pl.BlockSpec((1, 3), const),                    # b3
            ],
            out_specs=pl.BlockSpec((TILE_B, 3), lambda i: (i, 0)),
        ),
        compiler_params=pltpu.CompilerParams(
            dimension_semantics=("parallel",),   # megacore sharding on v7x
        ),
    )(x, w1, b1, w2, b2, w3, b3)

    return out[:B]


def init_params(key):
    """Deterministic init matching nn.Linear default (U(-1/sqrt(fan_in), +))."""
    def linear(key, fan_in, fan_out):
        kw, kb = jax.random.split(key)
        bound = 1.0 / jnp.sqrt(fan_in)
        # stored as (in, out) so kernel does x @ W
        w = jax.random.uniform(kw, (fan_in, fan_out), jnp.float32, -bound, bound)
        b = jax.random.uniform(kb, (1, fan_out), jnp.float32, -bound, bound)
        return w, b

    k1, k2, k3 = jax.random.split(key, 3)
    w1, b1 = linear(k1, 75, 128)
    w2, b2 = linear(k2, 128, 128)
    w3, b3 = linear(k3, 128, 3)
    return {"w1": w1, "b1": b1, "w2": w2, "b2": b2, "w3": w3, "b3": b3}


if __name__ == "__main__":
    key = jax.random.PRNGKey(0)
    kp, kx = jax.random.split(key)
    params = init_params(kp)

    B = 8
    x = jax.random.normal(kx, (B, 75), dtype=jnp.float32)

    out = neural_network_forward(x, params)
    out = jax.block_until_ready(out)

    # Pure-JAX f32 reference (kernel uses bf16 MXU operands -> loose tolerance).
    h1 = jnp.maximum(x @ params["w1"] + params["b1"], 0.0)
    h2 = jnp.maximum(h1 @ params["w2"] + params["b2"], 0.0)
    ref = jax.nn.sigmoid(h2 @ params["w3"] + params["b3"])
    assert out.shape == (B, 3)
    assert jnp.allclose(out, ref, atol=2e-2, rtol=0.0), (
        f"max abs err {jnp.max(jnp.abs(out - ref))}")

    print("KERNEL_OK")
</pallas_src>

<mosaic_0001>
module attributes {stable_mosaic.version = 11 : i64} {
  func.func @_mlp_kernel(%arg0: i32, %arg1: memref<16x75xbf16, #tpu.memory_space<vmem>>, %arg2: memref<75x128xbf16, #tpu.memory_space<vmem>>, %arg3: memref<1x128xf32, #tpu.memory_space<vmem>>, %arg4: memref<128x128xbf16, #tpu.memory_space<vmem>>, %arg5: memref<1x128xf32, #tpu.memory_space<vmem>>, %arg6: memref<128x3xbf16, #tpu.memory_space<vmem>>, %arg7: memref<1x3xf32, #tpu.memory_space<vmem>>, %arg8: memref<16x3xf32, #tpu.memory_space<vmem>>) attributes {dimension_semantics = [#tpu.dimension_semantics<parallel>], iteration_bounds = array<i64: 1>, scalar_prefetch = 0 : i64, scratch_operands = 0 : i64, tpu.core_type = #tpu.core_type<tc>, window_params = [{transform_indices = @transform_0, window_bounds = array<i64: 16, 75>}, {pipeline_mode = #tpu.pipeline_mode<synchronous>, transform_indices = @transform_1, window_bounds = array<i64: 75, 128>}, {pipeline_mode = #tpu.pipeline_mode<synchronous>, transform_indices = @transform_2, window_bounds = array<i64: 1, 128>}, {pipeline_mode = #tpu.pipeline_mode<synchronous>, transform_indices = @transform_3, window_bounds = array<i64: 128, 128>}, {pipeline_mode = #tpu.pipeline_mode<synchronous>, transform_indices = @transform_4, window_bounds = array<i64: 1, 128>}, {pipeline_mode = #tpu.pipeline_mode<synchronous>, transform_indices = @transform_5, window_bounds = array<i64: 128, 3>}, {pipeline_mode = #tpu.pipeline_mode<synchronous>, transform_indices = @transform_6, window_bounds = array<i64: 1, 3>}, {transform_indices = @transform_7, window_bounds = array<i64: 16, 3>}]} {
    %c0 = arith.constant 0 : index
    %c0_0 = arith.constant 0 : index
    %0 = vector.load %arg1[%c0, %c0_0] : memref<16x75xbf16, #tpu.memory_space<vmem>>, vector<16x75xbf16>
    %c0_1 = arith.constant 0 : index
    %c0_2 = arith.constant 0 : index
    %1 = vector.load %arg2[%c0_1, %c0_2] : memref<75x128xbf16, #tpu.memory_space<vmem>>, vector<75x128xbf16>
    %cst = arith.constant dense<0.000000e+00> : vector<16x128xf32>
    %2 = tpu.matmul %0, %1, %cst {dimension_numbers = #tpu.dot_dimension_numbers<[1], [0], [0], [1], [0, 0, 1, 1], [], []>} : vector<16x75xbf16>, vector<75x128xbf16>, vector<16x128xf32> -> vector<16x128xf32>
    %c0_3 = arith.constant 0 : index
    %c0_4 = arith.constant 0 : index
    %3 = vector.load %arg3[%c0_3, %c0_4] : memref<1x128xf32, #tpu.memory_space<vmem>>, vector<1x128xf32>
    %4 = vector.broadcast %3 : vector<1x128xf32> to vector<16x128xf32>
    %5 = arith.addf %2, %4 : vector<16x128xf32>
    %cst_5 = arith.constant 0.000000e+00 : f32
    %6 = vector.broadcast %cst_5 : f32 to vector<16x128xf32>
    %7 = arith.maximumf %5, %6 : vector<16x128xf32>
    %8 = arith.truncf %7 : vector<16x128xf32> to vector<16x128xbf16>
    %c0_6 = arith.constant 0 : index
    %c0_7 = arith.constant 0 : index
    %9 = vector.load %arg4[%c0_6, %c0_7] : memref<128x128xbf16, #tpu.memory_space<vmem>>, vector<128x128xbf16>
    %cst_8 = arith.constant dense<0.000000e+00> : vector<16x128xf32>
    %10 = tpu.matmul %8, %9, %cst_8 {dimension_numbers = #tpu.dot_dimension_numbers<[1], [0], [0], [1], [0, 0, 1, 1], [], []>} : vector<16x128xbf16>, vector<128x128xbf16>, vector<16x128xf32> -> vector<16x128xf32>
    %c0_9 = arith.constant 0 : index
    %c0_10 = arith.constant 0 : index
    %11 = vector.load %arg5[%c0_9, %c0_10] : memref<1x128xf32, #tpu.memory_space<vmem>>, vector<1x128xf32>
    %12 = vector.broadcast %11 : vector<1x128xf32> to vector<16x128xf32>
    %13 = arith.addf %10, %12 : vector<16x128xf32>
    %cst_11 = arith.constant 0.000000e+00 : f32
    %14 = vector.broadcast %cst_11 : f32 to vector<16x128xf32>
    %15 = arith.maximumf %13, %14 : vector<16x128xf32>
    %16 = arith.truncf %15 : vector<16x128xf32> to vector<16x128xbf16>
    %c0_12 = arith.constant 0 : index
    %c0_13 = arith.constant 0 : index
    %17 = vector.load %arg6[%c0_12, %c0_13] : memref<128x3xbf16, #tpu.memory_space<vmem>>, vector<128x3xbf16>
    %cst_14 = arith.constant dense<0.000000e+00> : vector<16x3xf32>
    %18 = tpu.matmul %16, %17, %cst_14 {dimension_numbers = #tpu.dot_dimension_numbers<[1], [0], [0], [1], [0, 0, 1, 1], [], []>} : vector<16x128xbf16>, vector<128x3xbf16>, vector<16x3xf32> -> vector<16x3xf32>
    %c0_15 = arith.constant 0 : index
    %c0_16 = arith.constant 0 : index
    %19 = vector.load %arg7[%c0_15, %c0_16] : memref<1x3xf32, #tpu.memory_space<vmem>>, vector<1x3xf32>
    %20 = vector.broadcast %19 : vector<1x3xf32> to vector<16x3xf32>
    %21 = arith.addf %18, %20 : vector<16x3xf32>
    %22 = arith.negf %21 : vector<16x3xf32>
    %23 = math.exp %22 : vector<16x3xf32>
    %cst_17 = arith.constant 1.000000e+00 : f32
    %24 = vector.broadcast %cst_17 : f32 to vector<16x3xf32>
    %25 = arith.addf %24, %23 : vector<16x3xf32>
    %26 = arith.divf %24, %25 : vector<16x3xf32>
    %c0_18 = arith.constant 0 : index
    %c0_19 = arith.constant 0 : index
    %27 = vector.load %arg8[%c0_18, %c0_19] : memref<16x3xf32, #tpu.memory_space<vmem>>, vector<16x3xf32>
    tpu.vector_store %arg8[%c0_18, %c0_19], %26 {strides = array<i32>} : memref<16x3xf32, #tpu.memory_space<vmem>>, vector<16x3xf32>,
    return
  }
  func.func @transform_0(%arg0: i32) -> (i32, i32) {
    %c0_i32 = arith.constant 0 : i32
    %c0_i32_0 = arith.constant 0 : i32
    return %arg0, %c0_i32 : i32, i32
  }
  func.func @transform_1(%arg0: i32) -> (i32, i32) {
    %c0_i32 = arith.constant 0 : i32
    %c0_i32_0 = arith.constant 0 : i32
    %c0_i32_1 = arith.constant 0 : i32
    return %c0_i32, %c0_i32_0 : i32, i32
  }
  func.func @transform_2(%arg0: i32) -> (i32, i32) {
    %c0_i32 = arith.constant 0 : i32
    %c0_i32_0 = arith.constant 0 : i32
    %c0_i32_1 = arith.constant 0 : i32
    return %c0_i32, %c0_i32_0 : i32, i32
  }
  func.func @transform_3(%arg0: i32) -> (i32, i32) {
    %c0_i32 = arith.constant 0 : i32
    %c0_i32_0 = arith.constant 0 : i32
    %c0_i32_1 = arith.constant 0 : i32
    return %c0_i32, %c0_i32_0 : i32, i32
  }
  func.func @transform_4(%arg0: i32) -> (i32, i32) {
    %c0_i32 = arith.constant 0 : i32
    %c0_i32_0 = arith.constant 0 : i32
    %c0_i32_1 = arith.constant 0 : i32
    return %c0_i32, %c0_i32_0 : i32, i32
  }
  func.func @transform_5(%arg0: i32) -> (i32, i32) {
    %c0_i32 = arith.constant 0 : i32
    %c0_i32_0 = arith.constant 0 : i32
    %c0_i32_1 = arith.constant 0 : i32
    return %c0_i32, %c0_i32_0 : i32, i32
  }
  func.func @transform_6(%arg0: i32) -> (i32, i32) {
    %c0_i32 = arith.constant 0 : i32
    %c0_i32_0 = arith.constant 0 : i32
    %c0_i32_1 = arith.constant 0 : i32
    return %c0_i32, %c0_i32_0 : i32, i32
  }
  func.func @transform_7(%arg0: i32) -> (i32, i32) {
    %c0_i32 = arith.constant 0 : i32
    %c0_i32_0 = arith.constant 0 : i32
    return %arg0, %c0_i32 : i32, i32
  }
}

</mosaic_0001>

<llo_original>
// kernel: tpu_custom_call.1
$region0: #{tpu_custom_call.1}
  #allocation0 [shape = 'u32[]', space=smem, size = 0x4, offset = 0x4, fixed_abs, tag = 'smem constant byte address 0x4 - core index']
  #allocation1 [shape = 'u32[144,128]{1,0:T(1,128)}', space=vmem, size = 0x12000, scoped, tag = 'internal scratch']
  %s0 = inlined_call_operand.hbm [shape: bf16[16,75], index: 0, kind: input, shape index: {}]
  %s1 = inlined_call_operand.hbm [shape: bf16[75,128], index: 1, kind: input, shape index: {}]
  %s2 = inlined_call_operand.vmem [shape: f32[1,128], index: 2, kind: input, shape index: {}]
  %s3 = inlined_call_operand.vmem [shape: bf16[128,128], index: 3, kind: input, shape index: {}]
  %s4 = inlined_call_operand.vmem [shape: f32[1,128], index: 4, kind: input, shape index: {}]
  %s5 = inlined_call_operand.vmem [shape: bf16[128,3], index: 5, kind: input, shape index: {}]
  %s6 = inlined_call_operand.vmem [shape: f32[1,3], index: 6, kind: input, shape index: {}]
  %s7 = inlined_call_operand.vmem [shape: f32[16,3], index: 7, kind: output, shape index: {}]
  %s8 = sld [smem:[#allocation0]]
  $region46: #{tpu_custom_call.1} parent=0
    _
  %s10 = ssub.s32 1, %s8
  %s11 = scalar_select 0, %s10, %s8
  $region1: #{tpu_custom_call.1} parent=0
    #allocation2 [shape = 'u8[4096]{0}', space=vmem, size = 0x1000, scoped, tag = 'input window, operand 0, single buffered']
    #allocation3 [shape = 's32[1]{0}', space=sflag, size = 0x4, scoped, tag = 'scoped memory for tpu_custom_call.1']
    #allocation4 [shape = 'u8[20480]{0}', space=vmem, size = 0x5000, scoped, tag = 'input window, operand 1, single buffered']
    #allocation5 [shape = 's32[1]{0}', space=sflag, size = 0x4, scoped, tag = 'scoped memory for tpu_custom_call.1']
    %12 = vsyncpa [#allocation3], 0
    %13 = vsyncpa [#allocation5], 0
    // Predicated region
    $region2: #{tpu_custom_call.1} parent=1 // pred_check
      _
    $region3: #{tpu_custom_call.1} parent=1 // pred_check_branch
      %15 = sbr.rel (0) target = $region5
    $region4: #{tpu_custom_call.1} parent=1 // pred_region
      %s17 = ssub.s32 128, 128
      %18 = vsyncadd [#allocation3], %s17
      %s19 = sshll.u32 [#allocation2], 4
      %s20 = int_to_ptr.vmem [resolvable:$true] %s19
      %25 = dma.hbm_to_vmem [thread:$0]  %s0, 128, %s20, [#allocation3], 64, 64, 4
    $region5: #{tpu_custom_call.1} parent=1 // pred_fallthru
      _
    // Predicated region
    $region6: #{tpu_custom_call.1} parent=1 // pred_check
      _
    $region7: #{tpu_custom_call.1} parent=1 // pred_check_branch
      %27 = sbr.rel (0) target = $region9
    $region8: #{tpu_custom_call.1} parent=1 // pred_region
      %s29 = ssub.s32 640, 640
      %30 = vsyncadd [#allocation5], %s29
      %s31 = sshll.u32 [#allocation4], 4
      %s32 = int_to_ptr.vmem [resolvable:$true] %s31
      %37 = dma.hbm_to_vmem [thread:$0]  %s1, 640, %s32, [#allocation5], 64, 64, 4
    $region9: #{tpu_custom_call.1} parent=1 // pred_fallthru
      _
    // Predicated region
    $region10: #{tpu_custom_call.1} parent=1 // pred_check
      _
    $region11: #{tpu_custom_call.1} parent=1 // pred_check_branch
      %39 = sbr.rel (0) target = $region13
    $region12: #{tpu_custom_call.1} parent=1 // pred_region
      _
    $region13: #{tpu_custom_call.1} parent=1 // pred_fallthru
      _
    // Predicated region
    $region14: #{tpu_custom_call.1} parent=1 // pred_check
      _
    $region15: #{tpu_custom_call.1} parent=1 // pred_check_branch
      %41 = sbr.rel (0) target = $region17
    $region16: #{tpu_custom_call.1} parent=1 // pred_region
      _
    $region17: #{tpu_custom_call.1} parent=1 // pred_fallthru
      _
    // Predicated region
    $region18: #{tpu_custom_call.1} parent=1 // pred_check
      _
    $region19: #{tpu_custom_call.1} parent=1 // pred_check_branch
      %43 = sbr.rel (0) target = $region21
    $region20: #{tpu_custom_call.1} parent=1 // pred_region
      _
    $region21: #{tpu_custom_call.1} parent=1 // pred_fallthru
      _
    // Predicated region
    $region22: #{tpu_custom_call.1} parent=1 // pred_check
      _
    $region23: #{tpu_custom_call.1} parent=1 // pred_check_branch
      %45 = sbr.rel (0) target = $region25
    $region24: #{tpu_custom_call.1} parent=1 // pred_region
      _
    $region25: #{tpu_custom_call.1} parent=1 // pred_fallthru
      _
    // Predicated region
    $region26: #{tpu_custom_call.1} parent=1 // pred_check
      _
    $region27: #{tpu_custom_call.1} parent=1 // pred_check_branch
      %47 = sbr.rel (0) target = $region29
    $region28: #{tpu_custom_call.1} parent=1 // pred_region
      _
    $region29: #{tpu_custom_call.1} parent=1 // pred_fallthru
      _
    // Predicated region
    $region30: #{tpu_custom_call.1} parent=1 // pred_check
      _
    $region31: #{tpu_custom_call.1} parent=1 // pred_check_branch
      %49 = sbr.rel (0) target = $region33
    $region32: #{tpu_custom_call.1} parent=1 // pred_region
      %50 = dma.done [#allocation3], 128
    $region33: #{tpu_custom_call.1} parent=1 // pred_fallthru
      _
    // Predicated region
    $region34: #{tpu_custom_call.1} parent=1 // pred_check
      _
    $region35: #{tpu_custom_call.1} parent=1 // pred_check_branch
      %52 = sbr.rel (0) target = $region37
    $region36: #{tpu_custom_call.1} parent=1 // pred_region
      %53 = dma.done [#allocation5], 640
    $region37: #{tpu_custom_call.1} parent=1 // pred_fallthru
      _
    %v55 = vld [vmem:[#allocation2] sm:$0xf]
    %v56 = vld [vmem:[#allocation2 + $0x4] sm:$0xf]
    %v57 = vld [vmem:[#allocation4] sm:$0xf]
    %v58 = vld [vmem:[#allocation4 + $0x4] sm:$0xf]
    %v59 = vld [vmem:[#allocation4 + $0x8] sm:$0xf]
    %v60 = vld [vmem:[#allocation4 + $0xc] sm:$0xf]
    %v61 = vld [vmem:[#allocation4 + $0x10] sm:$0xf]
    %v62 = vld [vmem:[#allocation4 + $0x14] sm:$0xf]
    %v63 = vld [vmem:[#allocation4 + $0x18] sm:$0xf]
    %v64 = vld [vmem:[#allocation4 + $0x1c] sm:$0xf]
    %v65 = vld [vmem:[#allocation4 + $0x20] sm:$0xf]
    %v66 = vld [vmem:[#allocation4 + $0x24] sm:$0x3]
    %v67 = vld [vmem:[%s2] sm:$0x1]
    %v69 = vlaneseq
    %v70 = vshrl.u32 %v69, 7
    %v71 = vsub.s32 0, %v70
    %v72 = vrot.slane %v67, %v71
    %v76 = vunpack.c.l.b16 %v55
    %v77 = vunpack.c.l.b16 %v56
    %v78 = vpack.c.b16 %v77, %v76
    %v89 = vunpack.c.l.b16 %v57
    %v90 = vunpack.c.l.b16 %v58
    %v91 = vunpack.c.l.b16 %v59
    %v92 = vunpack.c.l.b16 %v60
    %v93 = vunpack.c.l.b16 %v61
    %v94 = vunpack.c.l.b16 %v62
    %v95 = vunpack.c.l.b16 %v63
    %v96 = vunpack.c.l.b16 %v64
    %v97 = vunpack.c.l.b16 %v65
    %v98 = vunpack.c.l.b16 %v66
    %v99 = vpack.c.b16 %v90, %v89
    %v100 = vpack.c.b16 %v92, %v91
    %v101 = vpack.c.b16 %v94, %v93
    %v102 = vpack.c.b16 %v96, %v95
    %v103 = vpack.c.b16 %v98, %v97
    %vm108 = vcmask 613376
    %v110 = vsel %vm108, %v78, 0
    %vm112 = vcmask 1044480
    %vm113 = vcmask 1045504
    %v114 = vsel %vm112, 4294967295, 65535
    %v115 = vsel %vm113, %v114, 0
    %v117 = vand.u32 %v103, %v115
    %119 = vmatprep.subr.bf16.mxu0 0
    %120 = vmatpush1.bf16.msra.mxu0 0
    %121 = vmatprep.subr.bf16.mxu0 0
    %122 = vmatpush1.bf16.msra.mxu0 0
    %123 = vmatprep.subr.bf16.mxu0 0
    %124 = vmatpush1.bf16.msra.mxu0 0
    %125 = vmatprep.subr.bf16.mxu0 0
    %126 = vmatpush1.bf16.msra.mxu0 %v117
    %127 = vmatprep.subr.bf16.mxu0 0
    %128 = vmatpush1.bf16.msra.mxu0 %v102
    %129 = vmatprep.subr.bf16.mxu0 0
    %130 = vmatpush1.bf16.msra.mxu0 %v101
    %131 = vmatprep.subr.bf16.mxu0 0
    %132 = vmatpush1.bf16.msra.mxu0 %v100
    %133 = vmatprep.subr.bf16.mxu0 0
    %134 = vmatpush1.bf16.msra.mxu0 %v99
    %135 = vmatprep.subr.bf16.mxu0 0
    %136 = vmatpush2.bf16.msra.mxu0 0
    %137 = vmatprep.subr.bf16.mxu0 0
    %138 = vmatpush2.bf16.msra.mxu0 0
    %139 = vmatprep.subr.bf16.mxu0 0
    %140 = vmatpush2.bf16.msra.mxu0 0
    %141 = vmatprep.subr.bf16.mxu0 0
    %142 = vmatpush2.bf16.msra.mxu0 0
    %143 = vmatprep.subr.bf16.mxu0 0
    %144 = vmatpush2.bf16.msra.mxu0 0
    %145 = vmatprep.subr.bf16.mxu0 0
    %146 = vmatpush2.bf16.msra.mxu0 0
    %147 = vmatprep.subr.bf16.mxu0 0
    %148 = vmatpush2.bf16.msra.mxu0 0
    %149 = vmatprep.subr.bf16.mxu0 0
    %150 = vmatpush2.bf16.msra.mxu0 0
    %151 = vmatprep.mubr.bf16.mxu0 0
    %152 = vmatmul.mubr.bf16.gmra.mxu0 %v110
    %v153 = vpop.f32.mrf.mxu0
    %v154 = vadd.f32 %v72, %v153
    %v155 = vpop.f32.mrf.mxu0
    %v156 = vpop.f32.mrf.mxu0
    %v157 = vadd.f32 %v72, %v156
    %v158 = vpop.f32.mrf.mxu0
    %159 = vdwg.mxu0
    %v160 = vmax.f32 %v154, 0.0
    %v161 = vmax.f32 %v157, 0.0
    %v162 = vpack.c.bf16 %v161, %v160
    %v163 = vld [vmem:[%s3] sm:$0xf]
    %v164 = vld [vmem:[%s3 + $0x4] sm:$0xf]
    %v165 = vld [vmem:[%s3 + $0x8] sm:$0xf]
    %v166 = vld [vmem:[%s3 + $0xc] sm:$0xf]
    %v167 = vld [vmem:[%s3 + $0x10] sm:$0xf]
    %v168 = vld [vmem:[%s3 + $0x14] sm:$0xf]
    %v169 = vld [vmem:[%s3 + $0x18] sm:$0xf]
    %v170 = vld [vmem:[%s3 + $0x1c] sm:$0xf]
    %v171 = vld [vmem:[%s3 + $0x20] sm:$0xf]
    %v172 = vld [vmem:[%s3 + $0x24] sm:$0xf]
    %v173 = vld [vmem:[%s3 + $0x28] sm:$0xf]
    %v174 = vld [vmem:[%s3 + $0x2c] sm:$0xf]
    %v175 = vld [vmem:[%s3 + $0x30] sm:$0xf]
    %v176 = vld [vmem:[%s3 + $0x34] sm:$0xf]
    %v177 = vld [vmem:[%s3 + $0x38] sm:$0xf]
    %v178 = vld [vmem:[%s3 + $0x3c] sm:$0xf]
    %v179 = vld [vmem:[%s4] sm:$0x1]
    %v181 = vlaneseq
    %v182 = vshrl.u32 %v181, 7
    %v183 = vsub.s32 0, %v182
    %v184 = vrot.slane %v179, %v183
    %v202 = vunpack.c.l.b16 %v163
    %v203 = vunpack.c.l.b16 %v164
    %v204 = vunpack.c.l.b16 %v165
    %v205 = vunpack.c.l.b16 %v166
    %v206 = vunpack.c.l.b16 %v167
    %v207 = vunpack.c.l.b16 %v168
    %v208 = vunpack.c.l.b16 %v169
    %v209 = vunpack.c.l.b16 %v170
    %v210 = vunpack.c.l.b16 %v171
    %v211 = vunpack.c.l.b16 %v172
    %v212 = vunpack.c.l.b16 %v173
    %v213 = vunpack.c.l.b16 %v174
    %v214 = vunpack.c.l.b16 %v175
    %v215 = vunpack.c.l.b16 %v176
    %v216 = vunpack.c.l.b16 %v177
    %v217 = vunpack.c.l.b16 %v178
    %v218 = vpack.c.b16 %v203, %v202
    %v219 = vpack.c.b16 %v205, %v204
    %v220 = vpack.c.b16 %v207, %v206
    %v221 = vpack.c.b16 %v209, %v208
    %v222 = vpack.c.b16 %v211, %v210
    %v223 = vpack.c.b16 %v213, %v212
    %v224 = vpack.c.b16 %v215, %v214
    %v225 = vpack.c.b16 %v217, %v216
    %234 = vmatprep.subr.bf16.mxu0 0
    %235 = vmatpush1.bf16.msra.mxu0 %v225
    %236 = vmatprep.subr.bf16.mxu0 0
    %237 = vmatpush1.bf16.msra.mxu0 %v224
    %238 = vmatprep.subr.bf16.mxu0 0
    %239 = vmatpush1.bf16.msra.mxu0 %v223
    %240 = vmatprep.subr.bf16.mxu0 0
    %241 = vmatpush1.bf16.msra.mxu0 %v222
    %242 = vmatprep.subr.bf16.mxu0 0
    %243 = vmatpush1.bf16.msra.mxu0 %v221
    %244 = vmatprep.subr.bf16.mxu0 0
    %245 = vmatpush1.bf16.msra.mxu0 %v220
    %246 = vmatprep.subr.bf16.mxu0 0
    %247 = vmatpush1.bf16.msra.mxu0 %v219
    %248 = vmatprep.subr.bf16.mxu0 0
    %249 = vmatpush1.bf16.msra.mxu0 %v218
    %250 = vmatprep.subr.bf16.mxu0 0
    %251 = vmatpush2.bf16.msra.mxu0 0
    %252 = vmatprep.subr.bf16.mxu0 0
    %253 = vmatpush2.bf16.msra.mxu0 0
    %254 = vmatprep.subr.bf16.mxu0 0
    %255 = vmatpush2.bf16.msra.mxu0 0
    %256 = vmatprep.subr.bf16.mxu0 0
    %257 = vmatpush2.bf16.msra.mxu0 0
    %258 = vmatprep.subr.bf16.mxu0 0
    %259 = vmatpush2.bf16.msra.mxu0 0
    %260 = vmatprep.subr.bf16.mxu0 0
    %261 = vmatpush2.bf16.msra.mxu0 0
    %262 = vmatprep.subr.bf16.mxu0 0
    %263 = vmatpush2.bf16.msra.mxu0 0
    %264 = vmatprep.subr.bf16.mxu0 0
    %265 = vmatpush2.bf16.msra.mxu0 0
    %266 = vmatprep.mubr.bf16.mxu0 0
    %267 = vmatmul.mubr.bf16.gmra.mxu0 %v162
    %v268 = vpop.f32.mrf.mxu0
    %v269 = vadd.f32 %v184, %v268
    %v270 = vpop.f32.mrf.mxu0
    %v271 = vpop.f32.mrf.mxu0
    %v272 = vadd.f32 %v184, %v271
    %v273 = vpop.f32.mrf.mxu0
    %274 = vdwg.mxu0
    %v275 = vmax.f32 %v269, 0.0
    %v276 = vmax.f32 %v272, 0.0
    %v277 = vpack.c.bf16 %v276, %v275
    %v278 = vld [vmem:[%s5] sm:$0xf]
    %v279 = vld [vmem:[%s5 + $0x4] sm:$0xf]
    %v280 = vld [vmem:[%s5 + $0x8] sm:$0xf]
    %v281 = vld [vmem:[%s5 + $0xc] sm:$0xf]
    %v282 = vld [vmem:[%s5 + $0x10] sm:$0xf]
    %v283 = vld [vmem:[%s5 + $0x14] sm:$0xf]
    %v284 = vld [vmem:[%s5 + $0x18] sm:$0xf]
    %v285 = vld [vmem:[%s5 + $0x1c] sm:$0xf]
    %v286 = vld [vmem:[%s5 + $0x20] sm:$0xf]
    %v287 = vld [vmem:[%s5 + $0x24] sm:$0xf]
    %v288 = vld [vmem:[%s5 + $0x28] sm:$0xf]
    %v289 = vld [vmem:[%s5 + $0x2c] sm:$0xf]
    %v290 = vld [vmem:[%s5 + $0x30] sm:$0xf]
    %v291 = vld [vmem:[%s5 + $0x34] sm:$0xf]
    %v292 = vld [vmem:[%s5 + $0x38] sm:$0xf]
    %v293 = vld [vmem:[%s5 + $0x3c] sm:$0xf]
    %v294 = vld [vmem:[%s6] sm:$0x1]
    %v296 = vlaneseq
    %v297 = vshrl.u32 %v296, 7
    %v298 = vsub.s32 0, %v297
    %v299 = vrot.slane %v294, %v298
    %v317 = vunpack.c.l.b16 %v278
    %v318 = vunpack.c.l.b16 %v279
    %v319 = vunpack.c.l.b16 %v280
    %v320 = vunpack.c.l.b16 %v281
    %v321 = vunpack.c.l.b16 %v282
    %v322 = vunpack.c.l.b16 %v283
    %v323 = vunpack.c.l.b16 %v284
    %v324 = vunpack.c.l.b16 %v285
    %v325 = vunpack.c.l.b16 %v286
    %v326 = vunpack.c.l.b16 %v287
    %v327 = vunpack.c.l.b16 %v288
    %v328 = vunpack.c.l.b16 %v289
    %v329 = vunpack.c.l.b16 %v290
    %v330 = vunpack.c.l.b16 %v291
    %v331 = vunpack.c.l.b16 %v292
    %v332 = vunpack.c.l.b16 %v293
    %v333 = vpack.c.b16 %v318, %v317
    %v334 = vpack.c.b16 %v320, %v319
    %v335 = vpack.c.b16 %v322, %v321
    %v336 = vpack.c.b16 %v324, %v323
    %v337 = vpack.c.b16 %v326, %v325
    %v338 = vpack.c.b16 %v328, %v327
    %v339 = vpack.c.b16 %v330, %v329
    %v340 = vpack.c.b16 %v332, %v331
    %349 = vmatprep.subr.bf16.mxu0 0
    %350 = vmatpush1.bf16.msra.mxu0 %v340
    %351 = vmatprep.subr.bf16.mxu0 0
    %352 = vmatpush1.bf16.msra.mxu0 %v339
    %353 = vmatprep.subr.bf16.mxu0 0
    %354 = vmatpush1.bf16.msra.mxu0 %v338
    %355 = vmatprep.subr.bf16.mxu0 0
    %356 = vmatpush1.bf16.msra.mxu0 %v337
    %357 = vmatprep.subr.bf16.mxu0 0
    %358 = vmatpush1.bf16.msra.mxu0 %v336
    %359 = vmatprep.subr.bf16.mxu0 0
    %360 = vmatpush1.bf16.msra.mxu0 %v335
    %361 = vmatprep.subr.bf16.mxu0 0
    %362 = vmatpush1.bf16.msra.mxu0 %v334
    %363 = vmatprep.subr.bf16.mxu0 0
    %364 = vmatpush1.bf16.msra.mxu0 %v333
    %365 = vmatprep.subr.bf16.mxu0 0
    %366 = vmatpush2.bf16.msra.mxu0 0
    %367 = vmatprep.subr.bf16.mxu0 0
    %368 = vmatpush2.bf16.msra.mxu0 0
    %369 = vmatprep.subr.bf16.mxu0 0
    %370 = vmatpush2.bf16.msra.mxu0 0
    %371 = vmatprep.subr.bf16.mxu0 0
    %372 = vmatpush2.bf16.msra.mxu0 0
    %373 = vmatprep.subr.bf16.mxu0 0
    %374 = vmatpush2.bf16.msra.mxu0 0
    %375 = vmatprep.subr.bf16.mxu0 0
    %376 = vmatpush2.bf16.msra.mxu0 0
    %377 = vmatprep.subr.bf16.mxu0 0
    %378 = vmatpush2.bf16.msra.mxu0 0
    %379 = vmatprep.subr.bf16.mxu0 0
    %380 = vmatpush2.bf16.msra.mxu0 0
    %381 = vmatprep.mubr.bf16.mxu0 0
    %382 = vmatmul.mubr.bf16.gmra.mxu0 %v277
    %v383 = vpop.f32.mrf.mxu0
    %v384 = vadd.f32 %v299, %v383
    %v385 = vpop.f32.mrf.mxu0
    %v386 = vpop.f32.mrf.mxu0
    %v387 = vadd.f32 %v299, %v386
    %v388 = vpop.f32.mrf.mxu0
    %389 = vdwg.mxu0
    %v390 = vxor.u32 %v384, 2147483648
    %v391 = vxor.u32 %v387, 2147483648
    %v392 = vmul.f32 %v390, 1.442695
    %v393 = vpow.pop %v392
    %v394 = vmul.f32 %v391, 1.442695
    %v395 = vpow.pop %v394
    %v396 = vadd.f32 %v393, 1.0
    %v397 = vadd.f32 %v395, 1.0
    %v398 = vrcp.pop %v396
    %v399 = vmul.f32 1.0, %v398
    %v400 = vrcp.pop %v397
    %v401 = vmul.f32 1.0, %v400
    %vm402 = vcmask 23552
    %403 = vst.msk [vmem:[%s7] sm:$0xff] %vm402, %v399
    %404 = vst.msk [vmem:[%s7 + $0x8] sm:$0xff] %vm402, %v401
    // Predicated region
    $region38: #{tpu_custom_call.1} parent=1 // pred_check
      _
    $region39: #{tpu_custom_call.1} parent=1 // pred_check_branch
      %406 = sbr.rel (0) target = $region41
    $region40: #{tpu_custom_call.1} parent=1 // pred_region
      _
    $region41: #{tpu_custom_call.1} parent=1 // pred_fallthru
      _
    // Predicated region
    $region42: #{tpu_custom_call.1} parent=1 // pred_check
      _
    $region43: #{tpu_custom_call.1} parent=1 // pred_check_branch
      %408 = sbr.rel (0) target = $region45
    $region44: #{tpu_custom_call.1} parent=1 // pred_region
      _
    $region45: #{tpu_custom_call.1} parent=1 // pred_fallthru
      _
    %409 = vsyncpa [#allocation3], 1
    %410 = vsyncpa [#allocation5], 1

</llo_original>
